<compile_context>
chip_gen: v5e
topology: v5e:2x2
jax: 0.10.0
libtpu: 0.0.40
codegen_flags: <defaults>
</compile_context>

<pallas_src>
import functools

import jax
import jax.numpy as jnp
from jax.experimental import pallas as pl
from jax.experimental.pallas import tpu as pltpu


def _round_up(x: int, m: int) -> int:
    return ((x + m - 1) // m) * m


def _ce_kernel(loss_ref, action_ref, out_ref, *, n_rows: int):
    # loss_ref  : SMEM (1, 1) f32      -- indx + result - 1.1
    # action_ref: VMEM (C, TILE)       -- logits tile, original rows on the lane axis
    # out_ref   : VMEM (1, 1, TILE)    -- per-lane partial sums of the NLL (per part)
    p = pl.program_id(0)
    i = pl.program_id(1)
    tiles_per_part = pl.num_programs(1)

    @pl.when(i == 0)
    def _():
        out_ref[...] = jnp.zeros_like(out_ref)

    a = action_ref[...].astype(jnp.float32)          # (C, TILE)
    _, tn = a.shape
    loss_s = loss_ref[0, 0]

    # Global (original) row index carried by each lane of this tile.  The block
    # index is clamped in the index_map, so this (unclamped) index also masks
    # duplicate / fully-out-of-range tiles and the partial last tile.
    tile_idx = p * tiles_per_part + i
    grow = jax.lax.broadcasted_iota(jnp.int32, (1, tn), 1) + tile_idx * tn   # (1, TILE)
    valid = grow < n_rows

    # Per-row (per-lane) max and log-sum-exp of the original logits.
    amax = jnp.max(a, axis=0, keepdims=True)                                 # (1, TILE)
    lse = jnp.log(jnp.sum(jnp.exp(a - amax), axis=0, keepdims=True))         # (1, TILE)

    # target = argmax(a * (1 + loss_s*row)) selects the row max / min / element 0
    # depending on the sign of the per-row factor; the NLL only needs the value
    # at the target:  nll = amax + lse - selected.
    factor = jnp.float32(1.0) + loss_s * grow.astype(jnp.float32)            # (1, TILE)
    # The min-reduce is only needed when loss_s < 0 (otherwise factor >= 1 > 0
    # for every row and the where never selects it).
    amin = jax.lax.cond(
        loss_s < jnp.float32(0.0),
        lambda: jnp.min(a, axis=0, keepdims=True),
        lambda: amax,
    )
    selected = jnp.where(factor > jnp.float32(0.0), amax,
                         jnp.where(factor < jnp.float32(0.0), amin, a[0:1, :]))
    nll = amax + lse - selected                                              # (1, TILE)

    out_ref[...] += jnp.where(valid, nll, jnp.float32(0.0))[None]            # (1,1,TILE)


def cross_entropy_loss1(action, result, pred, *,
                        max_tile_rows: int = 8192, num_core_splits: int = 2):
    """Pallas implementation of CrossEntropyLoss1.forward(action, result, pred)."""
    action2d = jnp.squeeze(action)
    if action2d.ndim != 2:
        raise ValueError("action.squeeze() must be 2-D (N, C)")
    n, c = action2d.shape

    # indx = torch.argmax(pred) via XLA's native argmax; only the fused scalar
    # (indx + result - 1.1) enters the kernel through SMEM.
    indx = jnp.argmax(pred.reshape(-1)).astype(jnp.float32)
    loss_s = (indx + jnp.asarray(result, jnp.float32)
              - jnp.float32(1.1)).reshape(1, 1)

    # Lane-dense layout: rows of the original (N, C) go on the 128-lane axis.
    action_t = action2d.T                                    # (C, N)

    # Tile sizing: multiple of 128 lanes; capped so 2x the (sublane-padded)
    # input block stays well under v5e's 16 MiB default scoped VMEM.
    itemsize = jnp.dtype(action_t.dtype).itemsize
    c_padded = _round_up(c, 8)
    vmem_budget_bytes = 8 * 1024 * 1024
    rows_cap = max(128, (vmem_budget_bytes // (2 * c_padded * itemsize)) // 128 * 128)
    tile_rows = min(_round_up(max_tile_rows, 128), _round_up(n, 128), rows_cap)

    total_tiles = pl.cdiv(n, tile_rows)
    parts = max(1, int(num_core_splits))      # v7x: 2 TCs; harmless on 1-TC chips
    tiles_per_part = pl.cdiv(total_tiles, parts)
    grid = (parts, tiles_per_part)

    def action_map(p, i):
        t = p * tiles_per_part + i
        # Clamp duplicate / overhanging tiles to a valid block index; their rows
        # are discarded inside the kernel via the global-row-index mask.
        return (0, jnp.minimum(t, total_tiles - 1))

    partials = pl.pallas_call(
        functools.partial(_ce_kernel, n_rows=n),
        grid=grid,
        out_shape=jax.ShapeDtypeStruct((parts, 1, tile_rows), jnp.float32),
        in_specs=[
            pl.BlockSpec(memory_space=pltpu.MemorySpace.SMEM),   # fused loss scalar
            pl.BlockSpec((c, tile_rows), action_map),            # logits tile
        ],
        out_specs=pl.BlockSpec((1, 1, tile_rows), lambda p, i: (p, 0, 0)),
        compiler_params=pltpu.CompilerParams(
            dimension_semantics=("parallel", "arbitrary")),
    )(loss_s, action_t)

    # Tiny final reduction over (parts, tile_rows) lanes + mean, done by XLA.
    return jnp.sum(partials) / jnp.float32(n)


def _reference(action, result, pred):
    # Pure-JAX mirror of the PyTorch forward, for verification.
    indx = jnp.argmax(pred.reshape(-1))
    a = jnp.squeeze(action).astype(jnp.float32)
    loss = indx.astype(jnp.float32) + result - 1.1
    i = jnp.arange(a.shape[0], dtype=jnp.float32)[:, None]
    scaled = a + loss * a * i
    target = jnp.argmax(scaled, axis=1)
    logp = jax.nn.log_softmax(a, axis=1)
    nll = -jnp.take_along_axis(logp, target[:, None], axis=1)[:, 0]
    return jnp.mean(nll)


if __name__ == "__main__":
    key = jax.random.PRNGKey(0)
    k1, k2, k3, k4 = jax.random.split(key, 4)

    # Module-sized test: action (8,1,10) -> squeeze -> (8,10); pred (2,8); scalar result.
    action = jax.random.normal(k1, (8, 1, 10), jnp.float32)
    pred = jax.random.normal(k2, (2, 8), jnp.float32)
    result = jax.random.normal(k3, (), jnp.float32)

    loss = cross_entropy_loss1(action, result, pred)
    jax.block_until_ready(loss)
    ref = _reference(action, result, pred)
    assert jnp.allclose(loss, ref, atol=1e-4, rtol=1e-5), (loss, ref)

    # Multi-tile grid, partial last tile and a clamped duplicate tile on the
    # second core-split part.
    action_big = jax.random.normal(k4, (600, 10), jnp.float32)
    loss_big = cross_entropy_loss1(action_big, result, pred, max_tile_rows=256)
    jax.block_until_ready(loss_big)
    ref_big = _reference(action_big, result, pred)
    assert jnp.allclose(loss_big, ref_big, atol=1e-4, rtol=1e-5), (loss_big, ref_big)

    # Strongly negative scalar -> exercises the gated amin (argmin-of-row) branch.
    result_neg = jnp.float32(-50.0)
    loss_neg = cross_entropy_loss1(action_big, result_neg, pred, max_tile_rows=256)
    jax.block_until_ready(loss_neg)
    ref_neg = _reference(action_big, result_neg, pred)
    assert jnp.allclose(loss_neg, ref_neg, atol=1e-4, rtol=1e-5), (loss_neg, ref_neg)

    print("KERNEL_OK")
</pallas_src>

<mosaic_0001>
module attributes {stable_mosaic.version = 11 : i64} {
  func.func @_ce_kernel(%arg0: i32, %arg1: i32, %arg2: memref<1x1xf32, #tpu.memory_space<smem>>, %arg3: memref<10x128xf32, #tpu.memory_space<vmem>>, %arg4: memref<1x1x128xf32, #tpu.memory_space<vmem>>) attributes {dimension_semantics = [#tpu.dimension_semantics<parallel>, #tpu.dimension_semantics<arbitrary>], iteration_bounds = array<i64: 2, 1>, scalar_prefetch = 0 : i64, scratch_operands = 0 : i64, tpu.core_type = #tpu.core_type<tc>, window_params = [{transform_indices = @transform_0, window_bounds = array<i64: 1, 1>}, {transform_indices = @transform_1, window_bounds = array<i64: 10, 128>}, {transform_indices = @transform_2, window_bounds = array<i64: 1, 1, 128>}]} {
    %c0_i32 = arith.constant 0 : i32
    %0 = arith.cmpi eq, %arg1, %c0_i32 : i32
    %1 = arith.extui %0 : i1 to i32
    %c0_i32_0 = arith.constant 0 : i32
    %2 = arith.cmpi ne, %1, %c0_i32_0 : i32
    scf.if %2 {
      %cst_17 = arith.constant 0.000000e+00 : f32
      %45 = vector.broadcast %cst_17 : f32 to vector<1x1x128xf32>
      %c0_18 = arith.constant 0 : index
      %c0_19 = arith.constant 0 : index
      %c0_20 = arith.constant 0 : index
      %46 = vector.load %arg4[%c0_18, %c0_19, %c0_20] : memref<1x1x128xf32, #tpu.memory_space<vmem>>, vector<1x1x128xf32>
      tpu.vector_store %arg4[%c0_18, %c0_19, %c0_20], %45 {strides = array<i32>} : memref<1x1x128xf32, #tpu.memory_space<vmem>>, vector<1x1x128xf32>,
    } else {
    }
    %c0 = arith.constant 0 : index
    %c0_1 = arith.constant 0 : index
    %3 = vector.load %arg3[%c0, %c0_1] : memref<10x128xf32, #tpu.memory_space<vmem>>, vector<10x128xf32>
    %c0_2 = arith.constant 0 : index
    %c0_3 = arith.constant 0 : index
    %4 = memref.load %arg2[%c0_2, %c0_3] : memref<1x1xf32, #tpu.memory_space<smem>>
    %c1_i32 = arith.constant 1 : i32
    %5 = arith.muli %arg0, %c1_i32 : i32
    %6 = arith.addi %5, %arg1 : i32
    %7 = tpu.iota {dimensions = array<i32: 1>} : vector<1x128xi32>
    %c128_i32 = arith.constant 128 : i32
    %8 = arith.muli %6, %c128_i32 : i32
    %9 = vector.broadcast %8 : i32 to vector<1x128xi32>
    %10 = arith.addi %7, %9 : vector<1x128xi32>
    %c8_i32 = arith.constant 8 : i32
    %11 = vector.broadcast %c8_i32 : i32 to vector<1x128xi32>
    %12 = arith.cmpi slt, %10, %11 : vector<1x128xi32>
    %cst = arith.constant dense<0xFF800000> : vector<128xf32>
    %13 = vector.multi_reduction <maximumf>, %3, %cst [0] : vector<10x128xf32> to vector<128xf32>
    %14 = vector.shape_cast %13 : vector<128xf32> to vector<1x128xf32>
    %15 = vector.broadcast %14 : vector<1x128xf32> to vector<10x128xf32>
    %16 = arith.subf %3, %15 : vector<10x128xf32>
    %17 = math.exp %16 : vector<10x128xf32>
    %cst_4 = arith.constant dense<0.000000e+00> : vector<128xf32>
    %18 = vector.multi_reduction <add>, %17, %cst_4 [0] : vector<10x128xf32> to vector<128xf32>
    %19 = vector.shape_cast %18 : vector<128xf32> to vector<1x128xf32>
    %20 = math.log %19 : vector<1x128xf32>
    %21 = arith.sitofp %10 : vector<1x128xi32> to vector<1x128xf32>
    %22 = vector.broadcast %4 : f32 to vector<1x128xf32>
    %23 = arith.mulf %22, %21 : vector<1x128xf32>
    %cst_5 = arith.constant 1.000000e+00 : f32
    %24 = vector.broadcast %cst_5 : f32 to vector<1x128xf32>
    %25 = arith.addf %24, %23 : vector<1x128xf32>
    %cst_6 = arith.constant 0.000000e+00 : f32
    %26 = arith.cmpf olt, %4, %cst_6 : f32
    %27 = arith.extui %26 : i1 to i32
    %c0_i32_7 = arith.constant 0 : i32
    %28 = arith.cmpi ne, %27, %c0_i32_7 : i32
    %29 = scf.if %28 -> (vector<1x128xf32>) {
      %cst_17 = arith.constant dense<0x7F800000> : vector<128xf32>
      %45 = vector.multi_reduction <minimumf>, %3, %cst_17 [0] : vector<10x128xf32> to vector<128xf32>
      %46 = vector.shape_cast %45 : vector<128xf32> to vector<1x128xf32>
      scf.yield %46 : vector<1x128xf32>
    } else {
      scf.yield %14 : vector<1x128xf32>
    }
    %cst_8 = arith.constant 0.000000e+00 : f32
    %30 = vector.broadcast %cst_8 : f32 to vector<1x128xf32>
    %31 = arith.cmpf ogt, %25, %30 : vector<1x128xf32>
    %cst_9 = arith.constant 0.000000e+00 : f32
    %32 = vector.broadcast %cst_9 : f32 to vector<1x128xf32>
    %33 = arith.cmpf olt, %25, %32 : vector<1x128xf32>
    %34 = vector.extract_strided_slice %3 {offsets = [0, 0], sizes = [1, 128], strides = [1, 1]} : vector<10x128xf32> to vector<1x128xf32>
    %35 = arith.select %33, %29, %34 : vector<1x128xi1>, vector<1x128xf32>
    %36 = arith.select %31, %14, %35 : vector<1x128xi1>, vector<1x128xf32>
    %37 = arith.addf %14, %20 : vector<1x128xf32>
    %38 = arith.subf %37, %36 : vector<1x128xf32>
    %c0_10 = arith.constant 0 : index
    %c0_11 = arith.constant 0 : index
    %c0_12 = arith.constant 0 : index
    %39 = vector.load %arg4[%c0_10, %c0_11, %c0_12] : memref<1x1x128xf32, #tpu.memory_space<vmem>>, vector<1x1x128xf32>
    %cst_13 = arith.constant 0.000000e+00 : f32
    %40 = vector.broadcast %cst_13 : f32 to vector<1x128xf32>
    %41 = arith.select %12, %38, %40 : vector<1x128xi1>, vector<1x128xf32>
    %42 = vector.shape_cast %41 : vector<1x128xf32> to vector<1x1x128xf32>
    %43 = arith.addf %39, %42 : vector<1x1x128xf32>
    %c0_14 = arith.constant 0 : index
    %c0_15 = arith.constant 0 : index
    %c0_16 = arith.constant 0 : index
    %44 = vector.load %arg4[%c0_14, %c0_15, %c0_16] : memref<1x1x128xf32, #tpu.memory_space<vmem>>, vector<1x1x128xf32>
    tpu.vector_store %arg4[%c0_14, %c0_15, %c0_16], %43 {strides = array<i32>} : memref<1x1x128xf32, #tpu.memory_space<vmem>>, vector<1x1x128xf32>,
    return
  }
  func.func @transform_0(%arg0: i32, %arg1: i32) -> (i32, i32) {
    %c0_i32 = arith.constant 0 : i32
    %c0_i32_0 = arith.constant 0 : i32
    %c0_i32_1 = arith.constant 0 : i32
    return %c0_i32, %c0_i32_0 : i32, i32
  }
  func.func @transform_1(%arg0: i32, %arg1: i32) -> (i32, i32) {
    %c1_i32 = arith.constant 1 : i32
    %0 = arith.muli %arg0, %c1_i32 : i32
    %1 = arith.addi %0, %arg1 : i32
    %c0_i32 = arith.constant 0 : i32
    %2 = arith.minsi %1, %c0_i32 : i32
    %c0_i32_0 = arith.constant 0 : i32
    %c0_i32_1 = arith.constant 0 : i32
    return %c0_i32_0, %2 : i32, i32
  }
  func.func @transform_2(%arg0: i32, %arg1: i32) -> (i32, i32, i32) {
    %c0_i32 = arith.constant 0 : i32
    %c0_i32_0 = arith.constant 0 : i32
    %c0_i32_1 = arith.constant 0 : i32
    return %arg0, %c0_i32, %c0_i32_0 : i32, i32, i32
  }
}

</mosaic_0001>

<llo_original>
// kernel: tpu_custom_call.1
$region0: #{tpu_custom_call.1}
  #allocation0 [shape = 'u32[]', space=smem, size = 0x4, offset = 0x4, fixed_abs, tag = 'smem constant byte address 0x4 - core index']
  #allocation1 [shape = 'u32[72,128]{1,0:T(1,128)}', space=vmem, size = 0x9000, scoped, tag = 'internal scratch']
  #allocation2 [shape = 'f32[1,1]{1,0:T(1,128)S(6)}', space=smem, size = 0x200, scoped, tag = 'scoped memory for tpu_custom_call.1']
  %s0 = inlined_call_operand.<no memory space> [shape: f32[1,1], index: 0, kind: input, shape index: {}]
  %s1 = inlined_call_operand.vmem [shape: f32[10,8], index: 1, kind: input, shape index: {}]
  %s2 = inlined_call_operand.hbm [shape: f32[2,1,128], index: 2, kind: output, shape index: {}]
  %s3 = sld [smem:[#allocation0]]
  $region53: #{tpu_custom_call.1} parent=0
    _
  %s5 = ssub.s32 1, %s3
  %s6 = scalar_select 0, %s5, %s3
  %7 = sst [smem:[#allocation2]] %s0
  $region1: #{tpu_custom_call.1} parent=0
    #allocation3 [shape = 'u8[1024]{0}', space=vmem, size = 0x400, scoped, tag = 'output window, operand 0']
    #allocation4 [shape = 's32[2]{0}', space=sflag, size = 0x8, scoped, tag = 'scoped memory for tpu_custom_call.1']
    %8 = vsyncpa [#allocation4], 0
    %s9 = scalar_lea.sflag [#allocation4], 1
    %10 = vsyncpa %s9, 0
    loop: start=0, step=1, limit=4
    $region2: #{tpu_custom_call.1} parent=1 // loop_pre_header
      _
    $region3: #{tpu_custom_call.1} parent=1 // loop_header
      %s12 = sphi 0, %s16
      %p13 = scmp.ge.s32.totalorder %s12, 4
      %s19 = sphi 0, %s31
      %s20 = sphi 0, %s27
      %s21 = sphi 0, %s19
      %s22 = sphi 0, %s20
      %s23 = sphi 0, %s21
      %s24 = sphi 0, %s22
      %s32 = sphi 0, %s32
      %s34 = sphi 0, %s32
      %s35 = sphi 0, %s34
      %s49 = sphi 0, %s35
      %s61 = sphi 0, %s63
      %s64 = sphi 0, %s61
      %s65 = sphi 0, %s64
      %s81 = sphi 0, %s65
      %s87 = sphi 0, %s89
      %s90 = sphi 0, %s87
      %s91 = sphi 0, %s90
      %s107 = sphi 0, %s91
    $region4: #{tpu_custom_call.1} parent=1 // loop_header_branch
      %15 = sbr.rel (%p13) target = $region8
    $region5: #{tpu_custom_call.1} parent=1 // loop_body
      %s17 = ssub.s32 %s12, 1
      %s18 = ssub.s32 %s12, 2
      %s25 = sadd.s32 1, %s20
      %p26 = scmp.ge.s32.totalorder %s25, 1
      %s27 = scalar_select %p26, 0, %s25
      %s28 = sadd.s32 1, %s19
      %s29 = scalar_select %p26, %s28, %s19
      %p30 = scmp.ge.s32.totalorder %s29, 2
      %s31 = scalar_select %p30, 0, %s29
      %s33 = sadd.s32 %s32, 1
      %p36 = scmp.eq.s32.totalorder %s12, 1
      %p37 = scmp.ne.s32.totalorder %s32, %s34
      %p38 = scmp.eq.s32.totalorder %s12, 0
      %p39 = por %p37, %p38
      %p40 = scmp.ne.s32.totalorder %s32, %s34
      %p41 = scmp.eq.s32.totalorder %s17, 1
      %p42 = por %p40, %p41
      %p43 = scmp.ne.s32.totalorder %s34, %s35
      %p44 = scmp.eq.s32.totalorder %s17, 0
      %p45 = por %p43, %p44
      %p46 = scmp.ne.s32.totalorder %s34, %s35
      %p47 = scmp.eq.s32.totalorder %s18, 1
      %p48 = por %p46, %p47
      %p50 = scmp.ne.s32.totalorder %s35, %s49
      %p51 = scmp.eq.s32.totalorder %s18, 0
      %p52 = por %p50, %p51
      %s53 = sadd.s32 %s19, %s20
      %p54 = scmp.lt.s32.totalorder %s53, 0
      %s55 = scalar_select %p54, %s53, 0
      %s56 = sadd.s32 %s31, %s27
      %p57 = scmp.lt.s32.totalorder %s56, 0
      %s58 = scalar_select %p57, %s56, 0
      %s59 = ssub.s32 %s55, %s58
      %p60 = scmp.eq.s32.totalorder %s59, 0
      %s62 = sadd.s32 %s61, 1
      %s63 = scalar_select %p60, %s61, %s62
      %p66 = pneg %p60
      %p67 = scmp.eq.s32.totalorder %s12, 1
      %p68 = por %p66, %p67
      %p69 = scmp.ne.s32.totalorder %s61, %s64
      %p70 = scmp.eq.s32.totalorder %s12, 0
      %p71 = por %p69, %p70
      %p72 = scmp.ne.s32.totalorder %s61, %s64
      %p73 = scmp.eq.s32.totalorder %s17, 1
      %p74 = por %p72, %p73
      %p75 = scmp.ne.s32.totalorder %s64, %s65
      %p76 = scmp.eq.s32.totalorder %s17, 0
      %p77 = por %p75, %p76
      %p78 = scmp.ne.s32.totalorder %s64, %s65
      %p79 = scmp.eq.s32.totalorder %s18, 1
      %p80 = por %p78, %p79
      %p82 = scmp.ne.s32.totalorder %s65, %s81
      %p83 = scmp.eq.s32.totalorder %s18, 0
      %p84 = por %p82, %p83
      %s85 = ssub.s32 %s19, %s31
      %p86 = scmp.eq.s32.totalorder %s85, 0
      %s88 = sadd.s32 %s87, 1
      %s89 = scalar_select %p86, %s87, %s88
      %p92 = pneg %p86
      %p93 = scmp.eq.s32.totalorder %s12, 1
      %p94 = por %p92, %p93
      %p95 = scmp.ne.s32.totalorder %s87, %s90
      %p96 = scmp.eq.s32.totalorder %s12, 0
      %p97 = por %p95, %p96
      %p98 = scmp.ne.s32.totalorder %s87, %s90
      %p99 = scmp.eq.s32.totalorder %s17, 1
      %p100 = por %p98, %p99
      %p101 = scmp.ne.s32.totalorder %s90, %s91
      %p102 = scmp.eq.s32.totalorder %s17, 0
      %p103 = por %p101, %p102
      %p104 = scmp.ne.s32.totalorder %s90, %s91
      %p105 = scmp.eq.s32.totalorder %s18, 1
      %p106 = por %p104, %p105
      %p108 = scmp.ne.s32.totalorder %s91, %s107
      %p109 = scmp.eq.s32.totalorder %s18, 0
      %p110 = por %p108, %p109
      %p111 = scmp.le.s32.totalorder 1, %s12
      %p112 = scmp.lt.s32.totalorder %s12, 3
      %p113 = pnand %p111, %p112
      %p114 = pneg %p113
      // Predicated region
      $region9: #{tpu_custom_call.1} parent=5 // pred_check
        _
      $region10: #{tpu_custom_call.1} parent=5 // pred_check_branch
        %116 = sbr.rel (%p113) target = $region12
      $region11: #{tpu_custom_call.1} parent=5 // pred_region
        %s117 = ssub.s32 %s12, 1
        // Predicated region
        $region13: #{tpu_custom_call.1} parent=11 // pred_check
          %p118 = pneg %p45
        $region14: #{tpu_custom_call.1} parent=11 // pred_check_branch
          %120 = sbr.rel (%p118) target = $region16
        $region15: #{tpu_custom_call.1} parent=11 // pred_region
          _
        $region16: #{tpu_custom_call.1} parent=11 // pred_fallthru
          _
      $region12: #{tpu_custom_call.1} parent=5 // pred_fallthru
        _
      %p121 = scmp.lt.s32.totalorder %s12, 2
      // Predicated region
      $region17: #{tpu_custom_call.1} parent=5 // pred_check
        %p122 = pneg %p121
      $region18: #{tpu_custom_call.1} parent=5 // pred_check_branch
        %124 = sbr.rel (%p122) target = $region20
      $region19: #{tpu_custom_call.1} parent=5 // pred_region
        // Predicated region
        $region21: #{tpu_custom_call.1} parent=19 // pred_check
          %p125 = pneg %p71
        $region22: #{tpu_custom_call.1} parent=19 // pred_check_branch
          %127 = sbr.rel (%p125) target = $region24
        $region23: #{tpu_custom_call.1} parent=19 // pred_region
          %s128 = sadd.s32 %s19, %s20
          %p129 = scmp.lt.s32.totalorder %s128, 0
          %s130 = scalar_select %p129, %s128, 0
          %p131 = scmp.lt.s32.totalorder %s130, 0
          %s132 = scalar_select %p131, %s130, 0
          %s133 = smul.addr %s132, 8
          %s134 = scalar_lea.vmem %s1, %s133
          %s135 = sadd.s32 %s19, %s20
          %p136 = scmp.lt.s32.totalorder %s135, 0
          %s137 = scalar_select %p136, %s135, 0
        $region24: #{tpu_custom_call.1} parent=19 // pred_fallthru
          _
      $region20: #{tpu_custom_call.1} parent=5 // pred_fallthru
        _
      %p138 = scmp.le.s32.totalorder 1, %s12
      %p139 = scmp.lt.s32.totalorder %s12, 3
      %p140 = pnand %p138, %p139
      %p141 = pneg %p140
      // Predicated region
      $region25: #{tpu_custom_call.1} parent=5 // pred_check
        _
      $region26: #{tpu_custom_call.1} parent=5 // pred_check_branch
        %143 = sbr.rel (%p140) target = $region28
      $region27: #{tpu_custom_call.1} parent=5 // pred_region
        %s144 = ssub.s32 %s12, 1
        %p145 = pneg %p45
        %p146 = pneg %p42
        %s147 = sadd.s32 %s21, %s22
        %p148 = scmp.lt.s32.totalorder %s147, 0
        %s149 = scalar_select %p148, %s147, 0
        %p150 = scmp.lt.s32.totalorder %s149, 0
        %s151 = scalar_select %p150, %s149, 0
        %s152 = smul.addr %s151, 8
        %s153 = scalar_lea.vmem %s1, %s152
        %p154 = pneg %p77
        %p155 = pneg %p74
        %p156 = pneg %p103
        %p157 = pneg %p100
        %s158 = sand.u32 %s90, 1
        %s159 = scalar_lea.sflag [#allocation4], %s158
        %s160 = sand.u32 %s90, 1
        %s161 = scalar_lea.vmem [#allocation3], %s160
        %s162 = sadd.s32 %s21, %s22
        %p163 = scmp.lt.s32.totalorder %s162, 0
        %s164 = scalar_select %p163, %s162, 0
        %p165 = scmp.lt.s32.totalorder %s164, 0
        %s166 = scalar_select %p165, %s164, 0
        %s167 = smul.addr %s166, 8
        %s168 = scalar_lea.vmem %s1, %s167
        %s169 = sadd.s32 %s21, %s22
        %p170 = scmp.lt.s32.totalorder %s169, 0
        %s171 = scalar_select %p170, %s169, 0
        %p172 = scmp.eq.s32.totalorder %s22, 0
        // Predicated region
        $region29: #{tpu_custom_call.1} parent=27 // pred_check
          %p173 = pneg %p172
        $region30: #{tpu_custom_call.1} parent=27 // pred_check_branch
          %175 = sbr.rel (%p173) target = $region32
        $region31: #{tpu_custom_call.1} parent=27 // pred_region
          %176 = vst [vmem:[%s161] sm:$0x1] 0.0
        $region32: #{tpu_custom_call.1} parent=27 // pred_fallthru
          _
        %v177 = vld [vmem:[%s168] sm:$0xff]
        %v178 = vld [vmem:[%s168 + $0x8] sm:$0x3]
        %s179 = sld [smem:[#allocation2]]
        %s180 = sadd.s32 %s21, %s22
        %v181 = vlaneseq
        %v182 = vand.u32 %v181, 127
        %s183 = smul.u32 %s180, 128
        %v184 = vstv %s183
        %v185 = vadd.s32 %v182, %v184
        %vm186 = vcmp.lt.s32.totalorder %v185, 8
        %vm187 = vcmask 1041408
        %v188 = vsel %vm187, %v178, -inf
        %v189 = vmax.f32 %v177, %v188
        %v190 = vrot.slane %v189, 4
        %v191 = vmax.f32 %v189, %v190
        %v192 = vrot.slane %v191, 2
        %v193 = vmax.f32 %v191, %v192
        %v194 = vrot.slane %v193, 1
        %v195 = vmax.f32 %v193, %v194
        %v196 = vsub.f32 %v177, %v195
        %v197 = vsub.f32 %v178, %v195
        %v198 = vmul.f32 %v196, 1.442695
        %v199 = vpow.pop %v198
        %v200 = vmul.f32 %v197, 1.442695
        %v201 = vpow.pop %v200
        %v202 = vsel %vm187, %v201, 0.0
        %v203 = vadd.f32 %v199, %v202
        %v204 = vrot.slane %v203, 4
        %v205 = vadd.f32 %v203, %v204
        %v206 = vrot.slane %v205, 2
        %v207 = vadd.f32 %v205, %v206
        %v208 = vrot.slane %v207, 1
        %v209 = vadd.f32 %v207, %v208
        %v210 = vlog2.pop %v209
        %v211 = vmul.f32 %v210, 0.6931472
        %v212 = vcvt.s32.f32 %v185
        %v213 = vstv %s179
        %v214 = vmul.f32 %v213, %v212
        %v215 = vadd.f32 %v214, 1.0
        %p216 = scmp.lt.f32.partialorder %s179, 0.0
        // Predicated region
        $region33: #{tpu_custom_call.1} parent=27 // pred_check
          %p217 = pneg %p216
        $region34: #{tpu_custom_call.1} parent=27 // pred_check_branch
          %219 = sbr.rel (%p217) target = $region36
        $region35: #{tpu_custom_call.1} parent=27 // pred_region
          %v220 = vsel %vm187, %v178, inf
          %v221 = vmin.f32 %v177, %v220
          %v222 = vrot.slane %v221, 4
          %v223 = vmin.f32 %v221, %v222
          %v224 = vrot.slane %v223, 2
          %v225 = vmin.f32 %v223, %v224
          %v226 = vrot.slane %v225, 1
          %v227 = vmin.f32 %v225, %v226
        $region36: #{tpu_custom_call.1} parent=27 // pred_fallthru
          %v228 = vphi 0, %v227
        %p229 = pneg %p216
        // Predicated region
        $region37: #{tpu_custom_call.1} parent=27 // pred_check
          _
        $region38: #{tpu_custom_call.1} parent=27 // pred_check_branch
          %231 = sbr.rel (%p216) target = $region40
        $region39: #{tpu_custom_call.1} parent=27 // pred_region
          _
        $region40: #{tpu_custom_call.1} parent=27 // pred_fallthru
          %v232 = vphi %v228, %v195
        %vm233 = vcmp.gt.f32.partialorder %v215, 0.0
        %vm234 = vcmp.lt.f32.partialorder %v215, 0.0
        %v235 = vsel %vm234, %v232, %v177
        %v236 = vsel %vm233, %v195, %v235
        %v237 = vadd.f32 %v195, %v211
        %v238 = vsub.f32 %v237, %v236
        %v239 = vld [vmem:[%s161] sm:$0x1]
        %v240 = vsel %vm186, %v238, 0.0
        %v241 = vadd.f32 %v239, %v240
        %242 = vst [vmem:[%s161] sm:$0x1] %v241
        %s243 = sand.u32 %s90, 1
        %s244 = scalar_lea.sflag [#allocation4], %s243
        %s245 = sand.u32 %s90, 1
        %s246 = scalar_lea.vmem [#allocation3], %s245
        // Predicated region
        $region41: #{tpu_custom_call.1} parent=27 // pred_check
          %p247 = pneg %p100
        $region42: #{tpu_custom_call.1} parent=27 // pred_check_branch
          %249 = sbr.rel (%p247) target = $region44
        $region43: #{tpu_custom_call.1} parent=27 // pred_region
          %251 = vsyncadd %s244, 0
          %s252 = scalar_lea.hbm %s2, %s21
          %s254 = sshll.u32 %s246, 4
          %s255 = int_to_ptr.vmem [resolvable:$true] %s254
          %s256 = sshll.u32 %s252, 4
          %s257 = int_to_ptr.hbm [resolvable:$true] %s256
          %259 = dma.vmem_to_hbm [thread:$0]  %s255, 16, %s257, %s244
        $region44: #{tpu_custom_call.1} parent=27 // pred_fallthru
          _
      $region28: #{tpu_custom_call.1} parent=5 // pred_fallthru
        _
      %p260 = scmp.le.s32.totalorder 2, %s12
      // Predicated region
      $region45: #{tpu_custom_call.1} parent=5 // pred_check
        %p261 = pneg %p260
      $region46: #{tpu_custom_call.1} parent=5 // pred_check_branch
        %263 = sbr.rel (%p261) target = $region48
      $region47: #{tpu_custom_call.1} parent=5 // pred_region
        %s264 = ssub.s32 %s12, 2
        // Predicated region
        $region49: #{tpu_custom_call.1} parent=47 // pred_check
          %p265 = pneg %p106
        $region50: #{tpu_custom_call.1} parent=47 // pred_check_branch
          %267 = sbr.rel (%p265) target = $region52
        $region51: #{tpu_custom_call.1} parent=47 // pred_region
          %s268 = sand.u32 %s91, 1
          %s269 = scalar_lea.sflag [#allocation4], %s268
          %s270 = sand.u32 %s91, 1
          %s271 = scalar_lea.vmem [#allocation3], %s270
          %273 = dma.done %s269, 16
        $region52: #{tpu_custom_call.1} parent=47 // pred_fallthru
          _
      $region48: #{tpu_custom_call.1} parent=5 // pred_fallthru
        _
    $region6: #{tpu_custom_call.1} parent=1 // loop_footer
      %s16 = sadd.s32 1, %s12
    $region7: #{tpu_custom_call.1} parent=1 // loop_footer_branch
      %11 = sbr.rel target = $region3
    $region8: #{tpu_custom_call.1} parent=1 // loop_exit
      _
    %274 = vsyncpa [#allocation4], 1
    %s275 = scalar_lea.sflag [#allocation4], 1
    %276 = vsyncpa %s275, 1

</llo_original>
